<compile_context>
chip_gen: v6e
topology: v6e:2x2x1
jax: 0.10.0
libtpu: 0.0.40
codegen_flags: <defaults>
</compile_context>

<pallas_src>
import functools
import math

import jax
import jax.numpy as jnp
from jax.experimental import pallas as pl
from jax.experimental.pallas import tpu as pltpu

VMEM_LIMIT = 32 * 1024 * 1024  # explicit scoped-VMEM cap (>= default on all chips)


# ----------------------------------------------------------------------------
# Parameter init helpers (match nn.init used in the module, deterministically)
# ----------------------------------------------------------------------------
def xavier_uniform_relu(key, din, dout, dtype=jnp.float32):
    """nn.init.xavier_uniform_(weight, gain=calculate_gain('relu')); stored (din, dout)."""
    gain = math.sqrt(2.0)
    limit = gain * math.sqrt(6.0 / (din + dout))
    return jax.random.uniform(key, (din, dout), dtype, minval=-limit, maxval=limit)


def torch_default_linear(key, din, dout, dtype=jnp.float32):
    """Default nn.Linear init (kaiming_uniform a=sqrt(5)) -> bound 1/sqrt(fan_in)."""
    kw, kb = jax.random.split(key)
    bound = 1.0 / math.sqrt(din)
    w = jax.random.uniform(kw, (din, dout), dtype, minval=-bound, maxval=bound)
    b = jax.random.uniform(kb, (1, dout), dtype, minval=-bound, maxval=bound)
    return w, b


def _pad_axis(x, multiple, axis):
    """Zero-pad `axis` of x up to a multiple; returns (padded, original_size)."""
    size = x.shape[axis]
    pad = (-size) % multiple
    if pad == 0:
        return x, size
    widths = [(0, 0)] * x.ndim
    widths[axis] = (0, pad)
    return jnp.pad(x, widths), size


# ----------------------------------------------------------------------------
# conv_fc: K-tiled linear, bf16 operands, f32 accumulator
# ----------------------------------------------------------------------------
def _linear_kernel(x_ref, w_ref, b_ref, o_ref, acc_ref, *, relu):
    @pl.when(pl.program_id(1) == 0)
    def _():
        acc_ref[...] = jnp.zeros_like(acc_ref)

    acc_ref[...] += jnp.dot(x_ref[...], w_ref[...],
                            preferred_element_type=jnp.float32)

    @pl.when(pl.program_id(1) == pl.num_programs(1) - 1)
    def _():
        h = acc_ref[...] + b_ref[...]
        if relu:
            h = jnp.maximum(h, 0.0)
        o_ref[...] = h.astype(o_ref.dtype)


def linear_pallas(x, w, b, *, relu=False, tm=128, tk=512, out_dtype=jnp.bfloat16):
    """y = x @ w + b (optional ReLU). x: (rows, din) any float, w: (din, dout) bf16."""
    rows0, din = x.shape
    dout = w.shape[1]
    x, rows0 = _pad_axis(x, tm, 0)
    rows = x.shape[0]
    tk = min(tk, din)
    assert din % tk == 0, (din, tk)
    out = pl.pallas_call(
        functools.partial(_linear_kernel, relu=relu),
        out_shape=jax.ShapeDtypeStruct((rows, dout), out_dtype),
        grid_spec=pltpu.PrefetchScalarGridSpec(
            num_scalar_prefetch=0,
            grid=(rows // tm, din // tk),
            in_specs=[
                pl.BlockSpec((tm, tk), lambda i, k: (i, k)),
                pl.BlockSpec((tk, dout), lambda i, k: (k, 0)),
                pl.BlockSpec((1, dout), lambda i, k: (0, 0)),
            ],
            out_specs=pl.BlockSpec((tm, dout), lambda i, k: (i, 0)),
            scratch_shapes=[pltpu.VMEM((tm, dout), jnp.float32)],
        ),
        compiler_params=pltpu.CompilerParams(
            dimension_semantics=("parallel", "arbitrary"),
            vmem_limit_bytes=VMEM_LIMIT),
    )(x.astype(jnp.bfloat16), w, b)
    return out[:rows0]


# ----------------------------------------------------------------------------
# Fold1 + Fold2 fused (FoldingNetSingle x2); concats become split-weight matmuls
# ----------------------------------------------------------------------------
def _fold_fused_kernel(xyz_ref, tok_ref, glob_ref,
                       w1x_ref, w1l_ref, w1g_ref, b1_ref,
                       w2_ref, b2_ref, w3_ref, b3_ref,
                       w4f_ref, w4l_ref, w4g_ref, b4_ref,
                       w5_ref, b5_ref, w6_ref, b6_ref,
                       o_ref):
    f32 = jnp.float32
    xyz = xyz_ref[0]    # (tm, 3)   bf16
    tok = tok_ref[0]    # (tm, T)   bf16  (mask_local, read once, used by both folds)
    glob = glob_ref[0]  # (1, T)    bf16  (mask_global, never broadcast in HBM)

    # Fold1: Linear(cat(xyz, local, global)) == xyz@W1x + local@W1l + global@W1g
    h = jnp.dot(xyz, w1x_ref[...], preferred_element_type=f32)
    h = h + jnp.dot(tok, w1l_ref[...], preferred_element_type=f32)
    h = h + jnp.dot(glob, w1g_ref[...], preferred_element_type=f32)   # (1,H) bcast
    h = jnp.maximum(h + b1_ref[...], 0.0)
    h = jnp.dot(h.astype(w2_ref.dtype), w2_ref[...], preferred_element_type=f32)
    h = jnp.maximum(h + b2_ref[...], 0.0)
    f1 = jnp.dot(h.astype(w3_ref.dtype), w3_ref[...], preferred_element_type=f32)
    f1 = f1 + b3_ref[...]                                             # (tm, 6), stays in VMEM

    # Fold2: Linear(cat(f1, local, global)) == f1@W4f + local@W4l + global@W4g
    g = jnp.dot(f1.astype(w4f_ref.dtype), w4f_ref[...], preferred_element_type=f32)
    g = g + jnp.dot(tok, w4l_ref[...], preferred_element_type=f32)
    g = g + jnp.dot(glob, w4g_ref[...], preferred_element_type=f32)
    g = jnp.maximum(g + b4_ref[...], 0.0)
    g = jnp.dot(g.astype(w5_ref.dtype), w5_ref[...], preferred_element_type=f32)
    g = jnp.maximum(g + b5_ref[...], 0.0)
    out = jnp.dot(g.astype(w6_ref.dtype), w6_ref[...], preferred_element_type=f32)
    out = out + b6_ref[...]                                           # (tm, 128) lane-dense
    o_ref[0] = out.astype(o_ref.dtype)


def fold_fused_pallas(xyz, tokens, mask_global, fold1, fold2, *, tm=128, out_pad=128):
    """FoldingNetSingle(Fold1) -> concat -> FoldingNetSingle(Fold2), fully fused.

    xyz:         (B, N, 3)   anchor coordinates
    tokens:      (B, N, T)   mask_local tokens (bf16)
    mask_global: (B, 1, T)   pooled global token (bf16)
    Returns (B, N, 6) float32.
    """
    B, N0, T = tokens.shape
    H = fold1["w2"].shape[0]
    xyz, _ = _pad_axis(xyz, tm, 1)
    tokens, _ = _pad_axis(tokens, tm, 1)
    Np = tokens.shape[1]
    bf = lambda a: a.astype(jnp.bfloat16)

    # pad the 6-wide output weight to a full lane width (unmasked stores)
    w6p = jnp.zeros((H, out_pad), jnp.bfloat16).at[:, :6].set(bf(fold2["w6"]))
    b6p = jnp.zeros((1, out_pad), jnp.float32).at[:, :6].set(fold2["b6"])

    args = (bf(xyz), bf(tokens), bf(mask_global),
            bf(fold1["w1_xyz"]), bf(fold1["w1_loc"]), bf(fold1["w1_glob"]), fold1["b1"],
            bf(fold1["w2"]), fold1["b2"], bf(fold1["w3"]), fold1["b3"],
            bf(fold2["w4_f"]), bf(fold2["w4_loc"]), bf(fold2["w4_glob"]), fold2["b4"],
            bf(fold2["w5"]), fold2["b5"], w6p, b6p)

    def rep(shape):  # grid-invariant parameter block
        return pl.BlockSpec(shape, lambda b, i: (0, 0))

    in_specs = [
        pl.BlockSpec((1, tm, 3), lambda b, i: (b, i, 0)),
        pl.BlockSpec((1, tm, T), lambda b, i: (b, i, 0)),
        pl.BlockSpec((1, 1, T), lambda b, i: (b, 0, 0)),
        rep((3, H)), rep((T, H)), rep((T, H)), rep((1, H)),
        rep((H, H)), rep((1, H)), rep((H, 6)), rep((1, 6)),
        rep((6, H)), rep((T, H)), rep((T, H)), rep((1, H)),
        rep((H, H)), rep((1, H)), rep((H, out_pad)), rep((1, out_pad)),
    ]

    out = pl.pallas_call(
        _fold_fused_kernel,
        out_shape=jax.ShapeDtypeStruct((B, Np, out_pad), jnp.float32),
        grid_spec=pltpu.PrefetchScalarGridSpec(
            num_scalar_prefetch=0,
            grid=(B, Np // tm),
            in_specs=in_specs,
            out_specs=pl.BlockSpec((1, tm, out_pad), lambda b, i: (b, i, 0)),
        ),
        compiler_params=pltpu.CompilerParams(
            dimension_semantics=("parallel", "parallel"),
            vmem_limit_bytes=VMEM_LIMIT),
    )(*args)
    return out[:, :N0, :6]


# ----------------------------------------------------------------------------
# Row L2-normalization (F.normalize, eps=1e-12) — done ONCE per operand
# ----------------------------------------------------------------------------
def _rownorm_kernel(x_ref, o_ref):
    x = x_ref[...].astype(jnp.float32)
    ss = jnp.sum(x * x, axis=-1, keepdims=True)
    inv = jax.lax.rsqrt(jnp.maximum(ss, 1e-24))   # == 1 / max(||x||, 1e-12)
    o_ref[...] = (x * inv).astype(o_ref.dtype)


def normalize_rows_pallas(x, *, tm=128, out_dtype=jnp.bfloat16):
    x, rows0 = _pad_axis(x, tm, 0)
    rows, c = x.shape
    out = pl.pallas_call(
        _rownorm_kernel,
        out_shape=jax.ShapeDtypeStruct((rows, c), out_dtype),
        grid_spec=pltpu.PrefetchScalarGridSpec(
            num_scalar_prefetch=0,
            grid=(rows // tm,),
            in_specs=[pl.BlockSpec((tm, c), lambda i: (i, 0))],
            out_specs=pl.BlockSpec((tm, c), lambda i: (i, 0)),
        ),
        compiler_params=pltpu.CompilerParams(
            dimension_semantics=("parallel",),
            vmem_limit_bytes=VMEM_LIMIT),
    )(x)
    return out[:rows0]


# ----------------------------------------------------------------------------
# Contrastive score: pure 2-D tiled bf16 matmul with pre-normalized operands
# ----------------------------------------------------------------------------
def _score_kernel(a_ref, bt_ref, o_ref, *, inv_temp):
    s = jnp.dot(a_ref[...], bt_ref[...], preferred_element_type=jnp.float32)
    o_ref[...] = s * inv_temp


def contrastive_score_pallas(mask_n, bank_t, *, temperature, tm=128, tn=128):
    """score = mask_n @ bank_t / temperature.

    mask_n: (rows, c)  row-normalized bf16
    bank_t: (c, nlab)  column-normalized (pre-transposed) bf16
    """
    mask_n, rows0 = _pad_axis(mask_n, tm, 0)
    bank_t, nlab0 = _pad_axis(bank_t, tn, 1)
    rows, c = mask_n.shape
    nlab = bank_t.shape[1]
    out = pl.pallas_call(
        functools.partial(_score_kernel, inv_temp=1.0 / temperature),
        out_shape=jax.ShapeDtypeStruct((rows, nlab), jnp.float32),
        grid_spec=pltpu.PrefetchScalarGridSpec(
            num_scalar_prefetch=0,
            grid=(rows // tm, nlab // tn),
            in_specs=[
                pl.BlockSpec((tm, c), lambda i, j: (i, 0)),
                pl.BlockSpec((c, tn), lambda i, j: (0, j)),
            ],
            out_specs=pl.BlockSpec((tm, tn), lambda i, j: (i, j)),
        ),
        compiler_params=pltpu.CompilerParams(
            dimension_semantics=("parallel", "parallel"),
            vmem_limit_bytes=VMEM_LIMIT),
    )(mask_n, bank_t)
    return out[:rows0, :nlab0]


# ----------------------------------------------------------------------------
# Model parameters (pretraining=True branch)
# ----------------------------------------------------------------------------
def init_params(key, token_dim):
    ks = jax.random.split(key, 8)
    T = token_dim
    conv_fc = torch_default_linear(ks[0], 2048, T)

    def fold_stack(keys, dims):
        ws, bs = [], []
        for k, din, dout in zip(keys, dims[:-1], dims[1:]):
            ws.append(xavier_uniform_relu(k, din, dout))
            bs.append(jnp.zeros((1, dout), jnp.float32))   # bias.data.fill_(0.0)
        return ws, bs

    f1_w, f1_b = fold_stack(ks[1:4], (2 * T + 3, 512, 512, 6))
    f2_w, f2_b = fold_stack(ks[4:7], (2 * T + 6, 512, 512, 6))

    # Row-split the first-layer weights so torch's concat inputs never materialize:
    # Fold1 input layout: [xyz(3) | local(T) | global(T)]
    fold1 = dict(w1_xyz=f1_w[0][:3], w1_loc=f1_w[0][3:3 + T], w1_glob=f1_w[0][3 + T:],
                 b1=f1_b[0], w2=f1_w[1], b2=f1_b[1], w3=f1_w[2], b3=f1_b[2])
    # Fold2 input layout: [fold1_out(6) | local(T) | global(T)]
    fold2 = dict(w4_f=f2_w[0][:6], w4_loc=f2_w[0][6:6 + T], w4_glob=f2_w[0][6 + T:],
                 b4=f2_b[0], w5=f2_w[1], b5=f2_b[1], w6=f2_w[2], b6=f2_b[2])
    return {"conv_fc": conv_fc, "fold1": fold1, "fold2": fold2}


# ----------------------------------------------------------------------------
# Partial forward (pretraining branch) using the Pallas kernels above
# ----------------------------------------------------------------------------
def forward_partial(params, backbone_features, clip_anchor_xyz, temperature):
    """
    backbone_features : (B, N, 2048) -- stand-in for the PSTConv backbone output
                        (B, L_out=1, 2048, N) permuted to (B, L_out, N, 2048).
    clip_anchor_xyz   : (B, N, 3)    -- stand-in for the FPS-sampled anchor xyz.
    """
    B, N, C_in = backbone_features.shape
    w_fc, b_fc = params["conv_fc"]
    T = w_fc.shape[1]

    # --- conv_fc projection (bf16 MXU, f32 accum, K-tiled) ---
    feats2d = backbone_features.reshape(B * N, C_in)
    tokens = linear_pallas(feats2d, w_fc.astype(jnp.bfloat16), b_fc)   # (B*N, T) bf16
    tokens3d = tokens.reshape(B, N, T)

    # label_global = max over frames of mean over points (single frame here), normalized
    label_global = jnp.mean(tokens3d.astype(jnp.float32), axis=1)      # (B, T)
    label_global = label_global / jnp.maximum(
        jnp.linalg.norm(label_global, axis=-1, keepdims=True), 1e-12)

    # mask_global stand-in (transformer global head undefined): pooled token, kept (B,1,T)
    mask_global = jnp.max(tokens3d, axis=1, keepdims=True)             # (B, 1, T)

    # --- Fold1 -> concat -> Fold2, single fused Pallas kernel ---
    mask_xyz = fold_fused_pallas(clip_anchor_xyz, tokens3d, mask_global,
                                 params["fold1"], params["fold2"])     # (B, N, 6)

    # --- contrastive score + cross-entropy ---
    # negative_extra stand-in: extra rows appended to the label bank
    negatives = jnp.flip(tokens[: tokens.shape[0] // 2], axis=0)
    label_bank = jnp.concatenate([tokens, negatives], axis=0)          # (nlab, T)
    mask_n = normalize_rows_pallas(tokens)                             # (B*N, T) bf16
    bank_n = normalize_rows_pallas(label_bank)                         # (nlab, T) bf16
    bank_t = jnp.transpose(bank_n)                                     # one-time (T, nlab)
    score_local = contrastive_score_pallas(mask_n, bank_t,
                                           temperature=temperature)    # (B*N, nlab) f32

    rows = score_local.shape[0]
    targets = jnp.arange(rows)
    logz = jax.scipy.special.logsumexp(score_local, axis=1)
    loss_local = jnp.mean(logz - score_local[targets, targets])

    # TODO(synk): ChamferDistance (loss_dist) has no definition in the provided
    # source; the combined loss therefore only carries loss_local here.
    loss = loss_local

    return loss, loss_local, mask_xyz, label_global, score_local


# ----------------------------------------------------------------------------
if __name__ == "__main__":
    key = jax.random.PRNGKey(0)
    k_param, k_xyz, k_feat, k_anchor = jax.random.split(key, 4)

    # Small, module-consistent shapes
    B, Sub_clips, L_sub_clip, N_point, C_xyz = 2, 4, 2, 128, 3
    token_dim = 64          # representation_dim (scaled down from 1024)
    temperature = 0.1

    params = init_params(k_param, token_dim)

    # Nominal model input (documented, consumed only by the undefined PSTConv backbone)
    xyzs = jax.random.normal(k_xyz, (B, Sub_clips, L_sub_clip, N_point, C_xyz),
                             dtype=jnp.float32)

    # Synthetic stand-ins for the undefined backbone / sampler outputs
    backbone_features = jax.random.normal(k_feat, (B, N_point, 2048), jnp.float32)
    clip_anchor_xyz = jax.random.normal(k_anchor, (B, N_point, 3), jnp.float32)

    outs = forward_partial(params, backbone_features, clip_anchor_xyz, temperature)
    outs = jax.block_until_ready(outs)

    loss, loss_local, mask_xyz, label_global, score_local = outs
    assert mask_xyz.shape == (B, N_point, 6)
    assert label_global.shape == (B, token_dim)
    assert score_local.shape == (B * N_point, B * N_point + B * N_point // 2)
    assert bool(jnp.isfinite(loss))

    print("KERNEL_OK")
</pallas_src>

<mosaic_0001>
module attributes {stable_mosaic.version = 11 : i64} {
  func.func @_linear_kernel(%arg0: i32, %arg1: i32, %arg2: memref<128x512xbf16, #tpu.memory_space<vmem>>, %arg3: memref<512x64xbf16, #tpu.memory_space<vmem>>, %arg4: memref<1x64xf32, #tpu.memory_space<vmem>>, %arg5: memref<128x64xbf16, #tpu.memory_space<vmem>>, %arg6: memref<128x64xf32, #tpu.memory_space<vmem>>) attributes {dimension_semantics = [#tpu.dimension_semantics<parallel>, #tpu.dimension_semantics<arbitrary>], iteration_bounds = array<i64: 2, 4>, scalar_prefetch = 0 : i64, scratch_operands = 1 : i64, tpu.core_type = #tpu.core_type<tc>, window_params = [{transform_indices = @transform_0, window_bounds = array<i64: 128, 512>}, {transform_indices = @transform_1, window_bounds = array<i64: 512, 64>}, {pipeline_mode = #tpu.pipeline_mode<synchronous>, transform_indices = @transform_2, window_bounds = array<i64: 1, 64>}, {transform_indices = @transform_3, window_bounds = array<i64: 128, 64>}]} {
    %c0_i32 = arith.constant 0 : i32
    %0 = arith.cmpi eq, %arg1, %c0_i32 : i32
    %1 = arith.extui %0 : i1 to i32
    %c0_i32_0 = arith.constant 0 : i32
    %2 = arith.cmpi ne, %1, %c0_i32_0 : i32
    scf.if %2 {
      %cst_9 = arith.constant 0.000000e+00 : f32
      %12 = vector.broadcast %cst_9 : f32 to vector<128x64xf32>
      %c0_10 = arith.constant 0 : index
      %c0_11 = arith.constant 0 : index
      %13 = vector.load %arg6[%c0_10, %c0_11] : memref<128x64xf32, #tpu.memory_space<vmem>>, vector<128x64xf32>
      tpu.vector_store %arg6[%c0_10, %c0_11], %12 {strides = array<i32>} : memref<128x64xf32, #tpu.memory_space<vmem>>, vector<128x64xf32>,
    } else {
    }
    %c0 = arith.constant 0 : index
    %c0_1 = arith.constant 0 : index
    %3 = vector.load %arg6[%c0, %c0_1] : memref<128x64xf32, #tpu.memory_space<vmem>>, vector<128x64xf32>
    %c0_2 = arith.constant 0 : index
    %c0_3 = arith.constant 0 : index
    %4 = vector.load %arg2[%c0_2, %c0_3] : memref<128x512xbf16, #tpu.memory_space<vmem>>, vector<128x512xbf16>
    %c0_4 = arith.constant 0 : index
    %c0_5 = arith.constant 0 : index
    %5 = vector.load %arg3[%c0_4, %c0_5] : memref<512x64xbf16, #tpu.memory_space<vmem>>, vector<512x64xbf16>
    %cst = arith.constant dense<0.000000e+00> : vector<128x64xf32>
    %6 = tpu.matmul %4, %5, %cst {dimension_numbers = #tpu.dot_dimension_numbers<[1], [0], [0], [1], [0, 0, 1, 1], [], []>} : vector<128x512xbf16>, vector<512x64xbf16>, vector<128x64xf32> -> vector<128x64xf32>
    %7 = arith.addf %3, %6 : vector<128x64xf32>
    %c0_6 = arith.constant 0 : index
    %c0_7 = arith.constant 0 : index
    %8 = vector.load %arg6[%c0_6, %c0_7] : memref<128x64xf32, #tpu.memory_space<vmem>>, vector<128x64xf32>
    tpu.vector_store %arg6[%c0_6, %c0_7], %7 {strides = array<i32>} : memref<128x64xf32, #tpu.memory_space<vmem>>, vector<128x64xf32>,
    %c3_i32 = arith.constant 3 : i32
    %9 = arith.cmpi eq, %arg1, %c3_i32 : i32
    %10 = arith.extui %9 : i1 to i32
    %c0_i32_8 = arith.constant 0 : i32
    %11 = arith.cmpi ne, %10, %c0_i32_8 : i32
    scf.if %11 {
      %c0_9 = arith.constant 0 : index
      %c0_10 = arith.constant 0 : index
      %12 = vector.load %arg6[%c0_9, %c0_10] : memref<128x64xf32, #tpu.memory_space<vmem>>, vector<128x64xf32>
      %c0_11 = arith.constant 0 : index
      %c0_12 = arith.constant 0 : index
      %13 = vector.load %arg4[%c0_11, %c0_12] : memref<1x64xf32, #tpu.memory_space<vmem>>, vector<1x64xf32>
      %14 = vector.broadcast %13 : vector<1x64xf32> to vector<128x64xf32>
      %15 = arith.addf %12, %14 : vector<128x64xf32>
      %16 = arith.truncf %15 : vector<128x64xf32> to vector<128x64xbf16>
      %c0_13 = arith.constant 0 : index
      %c0_14 = arith.constant 0 : index
      %17 = vector.load %arg5[%c0_13, %c0_14] : memref<128x64xbf16, #tpu.memory_space<vmem>>, vector<128x64xbf16>
      tpu.vector_store %arg5[%c0_13, %c0_14], %16 {strides = array<i32>} : memref<128x64xbf16, #tpu.memory_space<vmem>>, vector<128x64xbf16>,
    } else {
    }
    return
  }
  func.func @transform_0(%arg0: i32, %arg1: i32) -> (i32, i32) {
    %c0_i32 = arith.constant 0 : i32
    return %arg0, %arg1 : i32, i32
  }
  func.func @transform_1(%arg0: i32, %arg1: i32) -> (i32, i32) {
    %c0_i32 = arith.constant 0 : i32
    %c0_i32_0 = arith.constant 0 : i32
    return %arg1, %c0_i32 : i32, i32
  }
  func.func @transform_2(%arg0: i32, %arg1: i32) -> (i32, i32) {
    %c0_i32 = arith.constant 0 : i32
    %c0_i32_0 = arith.constant 0 : i32
    %c0_i32_1 = arith.constant 0 : i32
    return %c0_i32, %c0_i32_0 : i32, i32
  }
  func.func @transform_3(%arg0: i32, %arg1: i32) -> (i32, i32) {
    %c0_i32 = arith.constant 0 : i32
    %c0_i32_0 = arith.constant 0 : i32
    return %arg0, %c0_i32 : i32, i32
  }
}

</mosaic_0001>

<llo_original>
// kernel: tpu_custom_call.1
$region0: #{tpu_custom_call.1}
  #allocation0 [shape = 'u32[]', space=smem, size = 0x4, offset = 0x4, fixed_abs, tag = 'smem constant byte address 0x4 - core index']
  #allocation1 [shape = 'u32[144,128]{1,0:T(1,128)}', space=vmem, size = 0x12000, scoped, tag = 'internal scratch']
  #allocation2 [shape = 'f32[128,64]{1,0:T(8,128)}', space=vmem, size = 0x10000, scoped, tag = 'scratch operand']
  %s0 = inlined_call_operand.hbm [shape: bf16[256,2048], index: 0, kind: input, shape index: {}]
  %s1 = inlined_call_operand.vmem [shape: bf16[2048,64], index: 1, kind: input, shape index: {}]
  %s2 = inlined_call_operand.vmem [shape: f32[1,64], index: 2, kind: input, shape index: {}]
  %s3 = inlined_call_operand.vmem [shape: bf16[256,64], index: 3, kind: output, shape index: {}]
  %s4 = sld [smem:[#allocation0]]
  $region57: #{tpu_custom_call.1} parent=0
    _
  %s6 = ssub.s32 1, %s4
  %s7 = scalar_select 0, %s6, %s4
  $region1: #{tpu_custom_call.1} parent=0
    #allocation3 [shape = 'u8[262144]{0}', space=vmem, size = 0x40000, scoped, tag = 'input window, operand 0']
    #allocation4 [shape = 's32[2]{0}', space=sflag, size = 0x8, scoped, tag = 'scoped memory for tpu_custom_call.1']
    %8 = vsyncpa [#allocation4], 0
    %s9 = scalar_lea.sflag [#allocation4], 1
    %10 = vsyncpa %s9, 0
    loop: start=0, step=1, limit=10
    $region2: #{tpu_custom_call.1} parent=1 // loop_pre_header
      _
    $region3: #{tpu_custom_call.1} parent=1 // loop_header
      %s12 = sphi 0, %s16
      %p13 = scmp.ge.s32.totalorder %s12, 10
      %s19 = sphi 0, %s31
      %s20 = sphi 0, %s27
      %s21 = sphi 0, %s19
      %s22 = sphi 0, %s20
      %s23 = sphi 0, %s21
      %s24 = sphi 0, %s22
      %s36 = sphi 0, %s38
      %s39 = sphi 0, %s36
      %s40 = sphi 0, %s39
      %s56 = sphi 0, %s40
      %s62 = sphi 0, %s64
      %s65 = sphi 0, %s62
      %s66 = sphi 0, %s65
      %s82 = sphi 0, %s66
      %s86 = sphi 0, %s86
      %s88 = sphi 0, %s86
      %s89 = sphi 0, %s88
      %s103 = sphi 0, %s89
      %s109 = sphi 0, %s111
      %s112 = sphi 0, %s109
      %s113 = sphi 0, %s112
      %s129 = sphi 0, %s113
    $region4: #{tpu_custom_call.1} parent=1 // loop_header_branch
      %15 = sbr.rel (%p13) target = $region8
    $region5: #{tpu_custom_call.1} parent=1 // loop_body
      %s17 = ssub.s32 %s12, 1
      %s18 = ssub.s32 %s12, 2
      %s25 = sadd.s32 1, %s20
      %p26 = scmp.ge.s32.totalorder %s25, 4
      %s27 = scalar_select %p26, 0, %s25
      %s28 = sadd.s32 1, %s19
      %s29 = scalar_select %p26, %s28, %s19
      %p30 = scmp.ge.s32.totalorder %s29, 2
      %s31 = scalar_select %p30, 0, %s29
      %s32 = ssub.s32 %s19, %s31
      %s33 = ssub.s32 %s20, %s27
      %s34 = sor.u32 %s32, %s33
      %p35 = scmp.eq.s32.totalorder %s34, 0
      %s37 = sadd.s32 %s36, 1
      %s38 = scalar_select %p35, %s36, %s37
      %p41 = pneg %p35
      %p42 = scmp.eq.s32.totalorder %s12, 7
      %p43 = por %p41, %p42
      %p44 = scmp.ne.s32.totalorder %s36, %s39
      %p45 = scmp.eq.s32.totalorder %s12, 0
      %p46 = por %p44, %p45
      %p47 = scmp.ne.s32.totalorder %s36, %s39
      %p48 = scmp.eq.s32.totalorder %s17, 7
      %p49 = por %p47, %p48
      %p50 = scmp.ne.s32.totalorder %s39, %s40
      %p51 = scmp.eq.s32.totalorder %s17, 0
      %p52 = por %p50, %p51
      %p53 = scmp.ne.s32.totalorder %s39, %s40
      %p54 = scmp.eq.s32.totalorder %s18, 7
      %p55 = por %p53, %p54
      %p57 = scmp.ne.s32.totalorder %s40, %s56
      %p58 = scmp.eq.s32.totalorder %s18, 0
      %p59 = por %p57, %p58
      %s60 = ssub.s32 %s20, %s27
      %p61 = scmp.eq.s32.totalorder %s60, 0
      %s63 = sadd.s32 %s62, 1
      %s64 = scalar_select %p61, %s62, %s63
      %p67 = pneg %p61
      %p68 = scmp.eq.s32.totalorder %s12, 7
      %p69 = por %p67, %p68
      %p70 = scmp.ne.s32.totalorder %s62, %s65
      %p71 = scmp.eq.s32.totalorder %s12, 0
      %p72 = por %p70, %p71
      %p73 = scmp.ne.s32.totalorder %s62, %s65
      %p74 = scmp.eq.s32.totalorder %s17, 7
      %p75 = por %p73, %p74
      %p76 = scmp.ne.s32.totalorder %s65, %s66
      %p77 = scmp.eq.s32.totalorder %s17, 0
      %p78 = por %p76, %p77
      %p79 = scmp.ne.s32.totalorder %s65, %s66
      %p80 = scmp.eq.s32.totalorder %s18, 7
      %p81 = por %p79, %p80
      %p83 = scmp.ne.s32.totalorder %s66, %s82
      %p84 = scmp.eq.s32.totalorder %s18, 0
      %p85 = por %p83, %p84
      %s87 = sadd.s32 %s86, 1
      %p90 = scmp.eq.s32.totalorder %s12, 7
      %p91 = scmp.ne.s32.totalorder %s86, %s88
      %p92 = scmp.eq.s32.totalorder %s12, 0
      %p93 = por %p91, %p92
      %p94 = scmp.ne.s32.totalorder %s86, %s88
      %p95 = scmp.eq.s32.totalorder %s17, 7
      %p96 = por %p94, %p95
      %p97 = scmp.ne.s32.totalorder %s88, %s89
      %p98 = scmp.eq.s32.totalorder %s17, 0
      %p99 = por %p97, %p98
      %p100 = scmp.ne.s32.totalorder %s88, %s89
      %p101 = scmp.eq.s32.totalorder %s18, 7
      %p102 = por %p100, %p101
      %p104 = scmp.ne.s32.totalorder %s89, %s103
      %p105 = scmp.eq.s32.totalorder %s18, 0
      %p106 = por %p104, %p105
      %s107 = ssub.s32 %s19, %s31
      %p108 = scmp.eq.s32.totalorder %s107, 0
      %s110 = sadd.s32 %s109, 1
      %s111 = scalar_select %p108, %s109, %s110
      %p114 = pneg %p108
      %p115 = scmp.eq.s32.totalorder %s12, 7
      %p116 = por %p114, %p115
      %p117 = scmp.ne.s32.totalorder %s109, %s112
      %p118 = scmp.eq.s32.totalorder %s12, 0
      %p119 = por %p117, %p118
      %p120 = scmp.ne.s32.totalorder %s109, %s112
      %p121 = scmp.eq.s32.totalorder %s17, 7
      %p122 = por %p120, %p121
      %p123 = scmp.ne.s32.totalorder %s112, %s113
      %p124 = scmp.eq.s32.totalorder %s17, 0
      %p125 = por %p123, %p124
      %p126 = scmp.ne.s32.totalorder %s112, %s113
      %p127 = scmp.eq.s32.totalorder %s18, 7
      %p128 = por %p126, %p127
      %p130 = scmp.ne.s32.totalorder %s113, %s129
      %p131 = scmp.eq.s32.totalorder %s18, 0
      %p132 = por %p130, %p131
      %p133 = scmp.le.s32.totalorder 1, %s12
      %p134 = scmp.lt.s32.totalorder %s12, 9
      %p135 = pnand %p133, %p134
      %p136 = pneg %p135
      // Predicated region
      $region9: #{tpu_custom_call.1} parent=5 // pred_check
        _
      $region10: #{tpu_custom_call.1} parent=5 // pred_check_branch
        %138 = sbr.rel (%p135) target = $region12
      $region11: #{tpu_custom_call.1} parent=5 // pred_region
        %s139 = ssub.s32 %s12, 1
        // Predicated region
        $region13: #{tpu_custom_call.1} parent=11 // pred_check
          %p140 = pneg %p99
        $region14: #{tpu_custom_call.1} parent=11 // pred_check_branch
          %142 = sbr.rel (%p140) target = $region16
        $region15: #{tpu_custom_call.1} parent=11 // pred_region
          _
        $region16: #{tpu_custom_call.1} parent=11 // pred_fallthru
          _
      $region12: #{tpu_custom_call.1} parent=5 // pred_fallthru
        _
      %p143 = scmp.lt.s32.totalorder %s12, 8
      // Predicated region
      $region17: #{tpu_custom_call.1} parent=5 // pred_check
        %p144 = pneg %p143
      $region18: #{tpu_custom_call.1} parent=5 // pred_check_branch
        %146 = sbr.rel (%p144) target = $region20
      $region19: #{tpu_custom_call.1} parent=5 // pred_region
        // Predicated region
        $region21: #{tpu_custom_call.1} parent=19 // pred_check
          %p147 = pneg %p46
        $region22: #{tpu_custom_call.1} parent=19 // pred_check_branch
          %149 = sbr.rel (%p147) target = $region24
        $region23: #{tpu_custom_call.1} parent=19 // pred_region
          %s150 = sand.u32 %s36, 1
          %s151 = scalar_lea.sflag [#allocation4], %s150
          %s152 = sand.u32 %s36, 1
          %s153 = smul.addr %s152, 256
          %s154 = scalar_lea.vmem [#allocation3], %s153
          %s155 = smul.u32 16, %s19
          %s156 = smul.u32 4, %s20
          %s158 = ssub.s32 4096, 4096
          %159 = vsyncadd %s151, %s158
          %s160 = smul.addr %s155, 16
          %s161 = sadd.s32 %s156, %s160
          %s162 = smul.addr %s161, 64
          %s163 = scalar_lea.hbm %s0, %s162
          %s164 = sshll.u32 %s154, 4
          %s165 = int_to_ptr.vmem [resolvable:$true] %s164
          %170 = dma.hbm_to_vmem [thread:$0]  %s163, 4096, %s165, %s151, 1024, 256, 16
        $region24: #{tpu_custom_call.1} parent=19 // pred_fallthru
          _
        // Predicated region
        $region25: #{tpu_custom_call.1} parent=19 // pred_check
          %p171 = pneg %p72
        $region26: #{tpu_custom_call.1} parent=19 // pred_check_branch
          %173 = sbr.rel (%p171) target = $region28
        $region27: #{tpu_custom_call.1} parent=19 // pred_region
          %s174 = smul.u32 64, %s20
          %p175 = scmp.lt.s32.totalorder %s174, 255
          %s176 = scalar_select %p175, %s174, 255
          %s177 = smul.addr %s176, 4
          %s178 = scalar_lea.vmem %s1, %s177
          %s179 = smul.u32 64, %s20
        $region28: #{tpu_custom_call.1} parent=19 // pred_fallthru
          _
      $region20: #{tpu_custom_call.1} parent=5 // pred_fallthru
        _
      %p180 = scmp.le.s32.totalorder 1, %s12
      %p181 = scmp.lt.s32.totalorder %s12, 9
      %p182 = pnand %p180, %p181
      %p183 = pneg %p182
      // Predicated region
      $region29: #{tpu_custom_call.1} parent=5 // pred_check
        _
      $region30: #{tpu_custom_call.1} parent=5 // pred_check_branch
        %185 = sbr.rel (%p182) target = $region32
      $region31: #{tpu_custom_call.1} parent=5 // pred_region
        %s186 = ssub.s32 %s12, 1
        %s187 = sand.u32 %s39, 1
        %s188 = scalar_lea.sflag [#allocation4], %s187
        %s189 = sand.u32 %s39, 1
        %s190 = smul.addr %s189, 256
        %s191 = scalar_lea.vmem [#allocation3], %s190
        // Predicated region
        $region33: #{tpu_custom_call.1} parent=31 // pred_check
          %p192 = pneg %p52
        $region34: #{tpu_custom_call.1} parent=31 // pred_check_branch
          %194 = sbr.rel (%p192) target = $region36
        $region35: #{tpu_custom_call.1} parent=31 // pred_region
          %195 = dma.done %s188, 4096
        $region36: #{tpu_custom_call.1} parent=31 // pred_fallthru
          _
        %s196 = sand.u32 %s39, 1
        %s197 = scalar_lea.sflag [#allocation4], %s196
        %s198 = sand.u32 %s39, 1
        %s199 = smul.addr %s198, 256
        %s200 = scalar_lea.vmem [#allocation3], %s199
        %p201 = pneg %p52
        %p202 = pneg %p49
        %s203 = smul.u32 64, %s22
        %p204 = scmp.lt.s32.totalorder %s203, 255
        %s205 = scalar_select %p204, %s203, 255
        %s206 = smul.addr %s205, 4
        %s207 = scalar_lea.vmem %s1, %s206
        %p208 = pneg %p78
        %p209 = pneg %p75
        %p210 = pneg %p99
        %p211 = pneg %p96
        %p212 = pneg %p125
        %p213 = pneg %p122
        %s214 = smul.u32 16, %s21
        %p215 = scmp.lt.s32.totalorder %s214, 31
        %s216 = scalar_select %p215, %s214, 31
        %s217 = smul.addr %s216, 4
        %s218 = scalar_lea.vmem %s3, %s217
        %s219 = smul.u32 16, %s21
        %s220 = smul.u32 4, %s22
        %s221 = smul.u32 64, %s22
        %p222 = scmp.lt.s32.totalorder %s221, 255
        %s223 = scalar_select %p222, %s221, 255
        %s224 = smul.addr %s223, 4
        %s225 = scalar_lea.vmem %s1, %s224
        %s226 = smul.u32 64, %s22
        %s227 = smul.u32 16, %s21
        %p228 = scmp.lt.s32.totalorder %s227, 31
        %s229 = scalar_select %p228, %s227, 31
        %s230 = smul.addr %s229, 4
        %s231 = scalar_lea.vmem %s3, %s230
        %s232 = smul.u32 16, %s21
        %p234 = scmp.eq.s32.totalorder %s22, 0
        // Predicated region
        $region37: #{tpu_custom_call.1} parent=31 // pred_check
          %p235 = pneg %p234
        $region38: #{tpu_custom_call.1} parent=31 // pred_check_branch
          %237 = sbr.rel (%p235) target = $region40
        $region39: #{tpu_custom_call.1} parent=31 // pred_region
          %vm238 = vcmask 523264
          %239 = vst.msk [vmem:[#allocation2] sm:$0xff] %vm238, 0.0
          %240 = vst.msk [vmem:[#allocation2 + $0x8] sm:$0xff] %vm238, 0.0
          %241 = vst.msk [vmem:[#allocation2 + $0x10] sm:$0xff] %vm238, 0.0
          %242 = vst.msk [vmem:[#allocation2 + $0x18] sm:$0xff] %vm238, 0.0
          %243 = vst.msk [vmem:[#allocation2 + $0x20] sm:$0xff] %vm238, 0.0
          %244 = vst.msk [vmem:[#allocation2 + $0x28] sm:$0xff] %vm238, 0.0
          %245 = vst.msk [vmem:[#allocation2 + $0x30] sm:$0xff] %vm238, 0.0
          %246 = vst.msk [vmem:[#allocation2 + $0x38] sm:$0xff] %vm238, 0.0
          %247 = vst.msk [vmem:[#allocation2 + $0x40] sm:$0xff] %vm238, 0.0
          %248 = vst.msk [vmem:[#allocation2 + $0x48] sm:$0xff] %vm238, 0.0
          %249 = vst.msk [vmem:[#allocation2 + $0x50] sm:$0xff] %vm238, 0.0
          %250 = vst.msk [vmem:[#allocation2 + $0x58] sm:$0xff] %vm238, 0.0
          %251 = vst.msk [vmem:[#allocation2 + $0x60] sm:$0xff] %vm238, 0.0
          %252 = vst.msk [vmem:[#allocation2 + $0x68] sm:$0xff] %vm238, 0.0
          %253 = vst.msk [vmem:[#allocation2 + $0x70] sm:$0xff] %vm238, 0.0
          %254 = vst.msk [vmem:[#allocation2 + $0x78] sm:$0xff] %vm238, 0.0
        $region40: #{tpu_custom_call.1} parent=31 // pred_fallthru
          _
        %v255 = vld [vmem:[#allocation2] sm:$0xff]
        %v256 = vld [vmem:[#allocation2 + $0x8] sm:$0xff]
        %v257 = vld [vmem:[#allocation2 + $0x10] sm:$0xff]
        %v258 = vld [vmem:[#allocation2 + $0x18] sm:$0xff]
        %v259 = vld [vmem:[#allocation2 + $0x20] sm:$0xff]
        %v260 = vld [vmem:[#allocation2 + $0x28] sm:$0xff]
        %v261 = vld [vmem:[#allocation2 + $0x30] sm:$0xff]
        %v262 = vld [vmem:[#allocation2 + $0x38] sm:$0xff]
        %v263 = vld [vmem:[#allocation2 + $0x40] sm:$0xff]
        %v264 = vld [vmem:[#allocation2 + $0x48] sm:$0xff]
        %v265 = vld [vmem:[#allocation2 + $0x50] sm:$0xff]
        %v266 = vld [vmem:[#allocation2 + $0x58] sm:$0xff]
        %v267 = vld [vmem:[#allocation2 + $0x60] sm:$0xff]
        %v268 = vld [vmem:[#allocation2 + $0x68] sm:$0xff]
        %v269 = vld [vmem:[#allocation2 + $0x70] sm:$0xff]
        %v270 = vld [vmem:[#allocation2 + $0x78] sm:$0xff]
        %v271 = vld [vmem:[%s191] sm:$0xff]
        %v272 = vld [vmem:[%s191 + $0x8] sm:$0xff]
        %v273 = vld [vmem:[%s191 + $0x10] sm:$0xff]
        %v274 = vld [vmem:[%s191 + $0x18] sm:$0xff]
        %v275 = vld [vmem:[%s191 + $0x20] sm:$0xff]
        %v276 = vld [vmem:[%s191 + $0x28] sm:$0xff]
        %v277 = vld [vmem:[%s191 + $0x30] sm:$0xff]
        %v278 = vld [vmem:[%s191 + $0x38] sm:$0xff]
        %v279 = vld [vmem:[%s191 + $0x40] sm:$0xff]
        %v280 = vld [vmem:[%s191 + $0x48] sm:$0xff]
        %v281 = vld [vmem:[%s191 + $0x50] sm:$0xff]
        %v282 = vld [vmem:[%s191 + $0x58] sm:$0xff]
        %v283 = vld [vmem:[%s191 + $0x60] sm:$0xff]
        %v284 = vld [vmem:[%s191 + $0x68] sm:$0xff]
        %v285 = vld [vmem:[%s191 + $0x70] sm:$0xff]
        %v286 = vld [vmem:[%s191 + $0x78] sm:$0xff]
        %v287 = vld [vmem:[%s191 + $0x80] sm:$0xff]
        %v288 = vld [vmem:[%s191 + $0x88] sm:$0xff]
        %v289 = vld [vmem:[%s191 + $0x90] sm:$0xff]
        %v290 = vld [vmem:[%s191 + $0x98] sm:$0xff]
        %v291 = vld [vmem:[%s191 + $0xa0] sm:$0xff]
        %v292 = vld [vmem:[%s191 + $0xa8] sm:$0xff]
        %v293 = vld [vmem:[%s191 + $0xb0] sm:$0xff]
        %v294 = vld [vmem:[%s191 + $0xb8] sm:$0xff]
        %v295 = vld [vmem:[%s191 + $0xc0] sm:$0xff]
        %v296 = vld [vmem:[%s191 + $0xc8] sm:$0xff]
        %v297 = vld [vmem:[%s191 + $0xd0] sm:$0xff]
        %v298 = vld [vmem:[%s191 + $0xd8] sm:$0xff]
        %v299 = vld [vmem:[%s191 + $0xe0] sm:$0xff]
        %v300 = vld [vmem:[%s191 + $0xe8] sm:$0xff]
        %v301 = vld [vmem:[%s191 + $0xf0] sm:$0xff]
        %v302 = vld [vmem:[%s191 + $0xf8] sm:$0xff]
        %v303 = vld [vmem:[%s225] sm:$0xf]
        %v304 = vld [vmem:[%s225 + $0x4] sm:$0xf]
        %v305 = vld [vmem:[%s225 + $0x8] sm:$0xf]
        %v306 = vld [vmem:[%s225 + $0xc] sm:$0xf]
        %v307 = vld [vmem:[%s225 + $0x10] sm:$0xf]
        %v308 = vld [vmem:[%s225 + $0x14] sm:$0xf]
        %v309 = vld [vmem:[%s225 + $0x18] sm:$0xf]
        %v310 = vld [vmem:[%s225 + $0x1c] sm:$0xf]
        %v311 = vld [vmem:[%s225 + $0x20] sm:$0xf]
        %v312 = vld [vmem:[%s225 + $0x24] sm:$0xf]
        %v313 = vld [vmem:[%s225 + $0x28] sm:$0xf]
        %v314 = vld [vmem:[%s225 + $0x2c] sm:$0xf]
        %v315 = vld [vmem:[%s225 + $0x30] sm:$0xf]
        %v316 = vld [vmem:[%s225 + $0x34] sm:$0xf]
        %v317 = vld [vmem:[%s225 + $0x38] sm:$0xf]
        %v318 = vld [vmem:[%s225 + $0x3c] sm:$0xf]
        %v319 = vld [vmem:[%s225 + $0x40] sm:$0xf]
        %v320 = vld [vmem:[%s225 + $0x44] sm:$0xf]
        %v321 = vld [vmem:[%s225 + $0x48] sm:$0xf]
        %v322 = vld [vmem:[%s225 + $0x4c] sm:$0xf]
        %v323 = vld [vmem:[%s225 + $0x50] sm:$0xf]
        %v324 = vld [vmem:[%s225 + $0x54] sm:$0xf]
        %v325 = vld [vmem:[%s225 + $0x58] sm:$0xf]
        %v326 = vld [vmem:[%s225 + $0x5c] sm:$0xf]
        %v327 = vld [vmem:[%s225 + $0x60] sm:$0xf]
        %v328 = vld [vmem:[%s225 + $0x64] sm:$0xf]
        %v329 = vld [vmem:[%s225 + $0x68] sm:$0xf]
        %v330 = vld [vmem:[%s225 + $0x6c] sm:$0xf]
        %v331 = vld [vmem:[%s225 + $0x70] sm:$0xf]
        %v332 = vld [vmem:[%s225 + $0x74] sm:$0xf]
        %v333 = vld [vmem:[%s225 + $0x78] sm:$0xf]
        %v334 = vld [vmem:[%s225 + $0x7c] sm:$0xf]
        %v335 = vld [vmem:[%s225 + $0x80] sm:$0xf]
        %v336 = vld [vmem:[%s225 + $0x84] sm:$0xf]
        %v337 = vld [vmem:[%s225 + $0x88] sm:$0xf]
        %v338 = vld [vmem:[%s225 + $0x8c] sm:$0xf]
        %v339 = vld [vmem:[%s225 + $0x90] sm:$0xf]
        %v340 = vld [vmem:[%s225 + $0x94] sm:$0xf]
        %v341 = vld [vmem:[%s225 + $0x98] sm:$0xf]
        %v342 = vld [vmem:[%s225 + $0x9c] sm:$0xf]
        %v343 = vld [vmem:[%s225 + $0xa0] sm:$0xf]
        %v344 = vld [vmem:[%s225 + $0xa4] sm:$0xf]
        %v345 = vld [vmem:[%s225 + $0xa8] sm:$0xf]
        %v346 = vld [vmem:[%s225 + $0xac] sm:$0xf]
        %v347 = vld [vmem:[%s225 + $0xb0] sm:$0xf]
        %v348 = vld [vmem:[%s225 + $0xb4] sm:$0xf]
        %v349 = vld [vmem:[%s225 + $0xb8] sm:$0xf]
        %v350 = vld [vmem:[%s225 + $0xbc] sm:$0xf]
        %v351 = vld [vmem:[%s225 + $0xc0] sm:$0xf]
        %v352 = vld [vmem:[%s225 + $0xc4] sm:$0xf]
        %v353 = vld [vmem:[%s225 + $0xc8] sm:$0xf]
        %v354 = vld [vmem:[%s225 + $0xcc] sm:$0xf]
        %v355 = vld [vmem:[%s225 + $0xd0] sm:$0xf]
        %v356 = vld [vmem:[%s225 + $0xd4] sm:$0xf]
        %v357 = vld [vmem:[%s225 + $0xd8] sm:$0xf]
        %v358 = vld [vmem:[%s225 + $0xdc] sm:$0xf]
        %v359 = vld [vmem:[%s225 + $0xe0] sm:$0xf]
        %v360 = vld [vmem:[%s225 + $0xe4] sm:$0xf]
        %v361 = vld [vmem:[%s225 + $0xe8] sm:$0xf]
        %v362 = vld [vmem:[%s225 + $0xec] sm:$0xf]
        %v363 = vld [vmem:[%s225 + $0xf0] sm:$0xf]
        %v364 = vld [vmem:[%s225 + $0xf4] sm:$0xf]
        %v365 = vld [vmem:[%s225 + $0xf8] sm:$0xf]
        %v366 = vld [vmem:[%s225 + $0xfc] sm:$0xf]
        %v399 = vunpack.c.l.b16 %v271
        %v400 = vunpack.c.h.b16 %v271
        %v401 = vunpack.c.l.b16 %v272
        %v402 = vunpack.c.h.b16 %v272
        %v403 = vunpack.c.l.b16 %v273
        %v404 = vunpack.c.h.b16 %v273
        %v405 = vunpack.c.l.b16 %v274
        %v406 = vunpack.c.h.b16 %v274
        %v407 = vunpack.c.l.b16 %v275
        %v408 = vunpack.c.h.b16 %v275
        %v409 = vunpack.c.l.b16 %v276
        %v410 = vunpack.c.h.b16 %v276
        %v411 = vunpack.c.l.b16 %v277
        %v412 = vunpack.c.h.b16 %v277
        %v413 = vunpack.c.l.b16 %v278
        %v414 = vunpack.c.h.b16 %v278
        %v415 = vunpack.c.l.b16 %v279
        %v416 = vunpack.c.h.b16 %v279
        %v417 = vunpack.c.l.b16 %v280
        %v418 = vunpack.c.h.b16 %v280
        %v419 = vunpack.c.l.b16 %v281
        %v420 = vunpack.c.h.b16 %v281
        %v421 = vunpack.c.l.b16 %v282
        %v422 = vunpack.c.h.b16 %v282
        %v423 = vunpack.c.l.b16 %v283
        %v424 = vunpack.c.h.b16 %v283
        %v425 = vunpack.c.l.b16 %v284
        %v426 = vunpack.c.h.b16 %v284
        %v427 = vunpack.c.l.b16 %v285
        %v428 = vunpack.c.h.b16 %v285
        %v429 = vunpack.c.l.b16 %v286
        %v430 = vunpack.c.h.b16 %v286
        %v431 = vunpack.c.l.b16 %v287
        %v432 = vunpack.c.h.b16 %v287
        %v433 = vunpack.c.l.b16 %v288
        %v434 = vunpack.c.h.b16 %v288
        %v435 = vunpack.c.l.b16 %v289
        %v436 = vunpack.c.h.b16 %v289
        %v437 = vunpack.c.l.b16 %v290
        %v438 = vunpack.c.h.b16 %v290
        %v439 = vunpack.c.l.b16 %v291
        %v440 = vunpack.c.h.b16 %v291
        %v441 = vunpack.c.l.b16 %v292
        %v442 = vunpack.c.h.b16 %v292
        %v443 = vunpack.c.l.b16 %v293
        %v444 = vunpack.c.h.b16 %v293
        %v445 = vunpack.c.l.b16 %v294
        %v446 = vunpack.c.h.b16 %v294
        %v447 = vunpack.c.l.b16 %v295
        %v448 = vunpack.c.h.b16 %v295
        %v449 = vunpack.c.l.b16 %v296
        %v450 = vunpack.c.h.b16 %v296
        %v451 = vunpack.c.l.b16 %v297
        %v452 = vunpack.c.h.b16 %v297
        %v453 = vunpack.c.l.b16 %v298
        %v454 = vunpack.c.h.b16 %v298
        %v455 = vunpack.c.l.b16 %v299
        %v456 = vunpack.c.h.b16 %v299
        %v457 = vunpack.c.l.b16 %v300
        %v458 = vunpack.c.h.b16 %v300
        %v459 = vunpack.c.l.b16 %v301
        %v460 = vunpack.c.h.b16 %v301
        %v461 = vunpack.c.l.b16 %v302
        %v462 = vunpack.c.h.b16 %v302
        %v463 = vpack.c.b16 %v403, %v399
        %v464 = vpack.c.b16 %v404, %v400
        %v465 = vpack.c.b16 %v405, %v401
        %v466 = vpack.c.b16 %v406, %v402
        %v467 = vpack.c.b16 %v411, %v407
        %v468 = vpack.c.b16 %v412, %v408
        %v469 = vpack.c.b16 %v413, %v409
        %v470 = vpack.c.b16 %v414, %v410
        %v471 = vpack.c.b16 %v419, %v415
        %v472 = vpack.c.b16 %v420, %v416
        %v473 = vpack.c.b16 %v421, %v417
        %v474 = vpack.c.b16 %v422, %v418
        %v475 = vpack.c.b16 %v427, %v423
        %v476 = vpack.c.b16 %v428, %v424
        %v477 = vpack.c.b16 %v429, %v425
        %v478 = vpack.c.b16 %v430, %v426
        %v479 = vpack.c.b16 %v435, %v431
        %v480 = vpack.c.b16 %v436, %v432
        %v481 = vpack.c.b16 %v437, %v433
        %v482 = vpack.c.b16 %v438, %v434
        %v483 = vpack.c.b16 %v443, %v439
        %v484 = vpack.c.b16 %v444, %v440
        %v485 = vpack.c.b16 %v445, %v441
        %v486 = vpack.c.b16 %v446, %v442
        %v487 = vpack.c.b16 %v451, %v447
        %v488 = vpack.c.b16 %v452, %v448
        %v489 = vpack.c.b16 %v453, %v449
        %v490 = vpack.c.b16 %v454, %v450
        %v491 = vpack.c.b16 %v459, %v455
        %v492 = vpack.c.b16 %v460, %v456
        %v493 = vpack.c.b16 %v461, %v457
        %v494 = vpack.c.b16 %v462, %v458
        %v591 = vunpack.c.l.b16 %v303
        %v592 = vunpack.c.l.b16 %v304
        %v593 = vunpack.c.l.b16 %v305
        %v594 = vunpack.c.l.b16 %v306
        %v595 = vunpack.c.l.b16 %v307
        %v596 = vunpack.c.l.b16 %v308
        %v597 = vunpack.c.l.b16 %v309
        %v598 = vunpack.c.l.b16 %v310
        %v599 = vunpack.c.l.b16 %v311
        %v600 = vunpack.c.l.b16 %v312
        %v601 = vunpack.c.l.b16 %v313
        %v602 = vunpack.c.l.b16 %v314
        %v603 = vunpack.c.l.b16 %v315
        %v604 = vunpack.c.l.b16 %v316
        %v605 = vunpack.c.l.b16 %v317
        %v606 = vunpack.c.l.b16 %v318
        %v607 = vunpack.c.l.b16 %v319
        %v608 = vunpack.c.l.b16 %v320
        %v609 = vunpack.c.l.b16 %v321
        %v610 = vunpack.c.l.b16 %v322
        %v611 = vunpack.c.l.b16 %v323
        %v612 = vunpack.c.l.b16 %v324
        %v613 = vunpack.c.l.b16 %v325
        %v614 = vunpack.c.l.b16 %v326
        %v615 = vunpack.c.l.b16 %v327
        %v616 = vunpack.c.l.b16 %v328
        %v617 = vunpack.c.l.b16 %v329
        %v618 = vunpack.c.l.b16 %v330
        %v619 = vunpack.c.l.b16 %v331
        %v620 = vunpack.c.l.b16 %v332
        %v621 = vunpack.c.l.b16 %v333
        %v622 = vunpack.c.l.b16 %v334
        %v623 = vunpack.c.l.b16 %v335
        %v624 = vunpack.c.l.b16 %v336
        %v625 = vunpack.c.l.b16 %v337
        %v626 = vunpack.c.l.b16 %v338
        %v627 = vunpack.c.l.b16 %v339
        %v628 = vunpack.c.l.b16 %v340
        %v629 = vunpack.c.l.b16 %v341
        %v630 = vunpack.c.l.b16 %v342
        %v631 = vunpack.c.l.b16 %v343
        %v632 = vunpack.c.l.b16 %v344
        %v633 = vunpack.c.l.b16 %v345
        %v634 = vunpack.c.l.b16 %v346
        %v635 = vunpack.c.l.b16 %v347
        %v636 = vunpack.c.l.b16 %v348
        %v637 = vunpack.c.l.b16 %v349
        %v638 = vunpack.c.l.b16 %v350
        %v639 = vunpack.c.l.b16 %v351
        %v640 = vunpack.c.l.b16 %v352
        %v641 = vunpack.c.l.b16 %v353
        %v642 = vunpack.c.l.b16 %v354
        %v643 = vunpack.c.l.b16 %v355
        %v644 = vunpack.c.l.b16 %v356
        %v645 = vunpack.c.l.b16 %v357
        %v646 = vunpack.c.l.b16 %v358
        %v647 = vunpack.c.l.b16 %v359
        %v648 = vunpack.c.l.b16 %v360
        %v649 = vunpack.c.l.b16 %v361
        %v650 = vunpack.c.l.b16 %v362
        %v651 = vunpack.c.l.b16 %v363
        %v652 = vunpack.c.l.b16 %v364
        %v653 = vunpack.c.l.b16 %v365
        %v654 = vunpack.c.l.b16 %v366
        %v655 = vpack.c.b16 %v592, %v591
        %v656 = vpack.c.b16 %v594, %v593
        %v657 = vpack.c.b16 %v596, %v595
        %v658 = vpack.c.b16 %v598, %v597
        %v659 = vpack.c.b16 %v600, %v599
        %v660 = vpack.c.b16 %v602, %v601
        %v661 = vpack.c.b16 %v604, %v603
        %v662 = vpack.c.b16 %v606, %v605
        %v663 = vpack.c.b16 %v608, %v607
        %v664 = vpack.c.b16 %v610, %v609
        %v665 = vpack.c.b16 %v612, %v611
        %v666 = vpack.c.b16 %v614, %v613
        %v667 = vpack.c.b16 %v616, %v615
        %v668 = vpack.c.b16 %v618, %v617
        %v669 = vpack.c.b16 %v620, %v619
        %v670 = vpack.c.b16 %v622, %v621
        %v671 = vpack.c.b16 %v624, %v623
        %v672 = vpack.c.b16 %v626, %v625
        %v673 = vpack.c.b16 %v628, %v627
        %v674 = vpack.c.b16 %v630, %v629
        %v675 = vpack.c.b16 %v632, %v631
        %v676 = vpack.c.b16 %v634, %v633
        %v677 = vpack.c.b16 %v636, %v635
        %v678 = vpack.c.b16 %v638, %v637
        %v679 = vpack.c.b16 %v640, %v639
        %v680 = vpack.c.b16 %v642, %v641
        %v681 = vpack.c.b16 %v644, %v643
        %v682 = vpack.c.b16 %v646, %v645
        %v683 = vpack.c.b16 %v648, %v647
        %v684 = vpack.c.b16 %v650, %v649
        %v685 = vpack.c.b16 %v652, %v651
        %v686 = vpack.c.b16 %v654, %v653
        %719 = vmatprep.subr.bf16.mxu0 0
        %720 = vmatpush1.bf16.msra.mxu0 %v662
        %721 = vmatprep.subr.bf16.mxu0 0
        %722 = vmatpush1.bf16.msra.mxu0 %v661
        %723 = vmatprep.subr.bf16.mxu0 0
        %724 = vmatpush1.bf16.msra.mxu0 %v660
        %725 = vmatprep.subr.bf16.mxu0 0
        %726 = vmatpush1.bf16.msra.mxu0 %v659
        %727 = vmatprep.subr.bf16.mxu0 0
        %728 = vmatpush1.bf16.msra.mxu0 %v658
        %729 = vmatprep.subr.bf16.mxu0 0
        %730 = vmatpush1.bf16.msra.mxu0 %v657
        %731 = vmatprep.subr.bf16.mxu0 0
        %732 = vmatpush1.bf16.msra.mxu0 %v656
        %733 = vmatprep.subr.bf16.mxu0 0
        %734 = vmatpush1.bf16.msra.mxu0 %v655
        %735 = vmatprep.subr.bf16.mxu0 0
        %736 = vmatpush2.bf16.msra.mxu0 %v670
        %737 = vmatprep.subr.bf16.mxu0 0
        %738 = vmatpush2.bf16.msra.mxu0 %v669
        %739 = vmatprep.subr.bf16.mxu0 0
        %740 = vmatpush2.bf16.msra.mxu0 %v668
        %741 = vmatprep.subr.bf16.mxu0 0
        %742 = vmatpush2.bf16.msra.mxu0 %v667
        %743 = vmatprep.subr.bf16.mxu0 0
        %744 = vmatpush2.bf16.msra.mxu0 %v666
        %745 = vmatprep.subr.bf16.mxu0 0
        %746 = vmatpush2.bf16.msra.mxu0 %v665
        %747 = vmatprep.subr.bf16.mxu0 0
        %748 = vmatpush2.bf16.msra.mxu0 %v664
        %749 = vmatprep.subr.bf16.mxu0 0
        %750 = vmatpush2.bf16.msra.mxu0 %v663
        %751 = vmatprep.mubr.bf16.mxu0 %v464
        %752 = vmatmul.mubr.bf16.gmra.mxu0 %v463
        %v753 = vpop.f32.mrf.mxu0
        %v754 = vadd.f32 0.0, %v753
        %v755 = vpop.f32.mrf.mxu0
        %v756 = vpop.f32.mrf.mxu0
        %v757 = vadd.f32 0.0, %v756
        %v758 = vpop.f32.mrf.mxu0
        %759 = vmatprep.mubr.bf16.mxu0 %v468
        %760 = vmatmul.mubr.bf16.gmra.mxu0 %v467
        %v761 = vpop.f32.mrf.mxu0
        %v762 = vadd.f32 0.0, %v761
        %v763 = vpop.f32.mrf.mxu0
        %v764 = vpop.f32.mrf.mxu0
        %v765 = vadd.f32 0.0, %v764
        %v766 = vpop.f32.mrf.mxu0
        %767 = vmatprep.mubr.bf16.mxu0 %v472
        %768 = vmatmul.mubr.bf16.gmra.mxu0 %v471
        %v769 = vpop.f32.mrf.mxu0
        %v770 = vadd.f32 0.0, %v769
        %v771 = vpop.f32.mrf.mxu0
        %v772 = vpop.f32.mrf.mxu0
        %v773 = vadd.f32 0.0, %v772
        %v774 = vpop.f32.mrf.mxu0
        %775 = vmatprep.mubr.bf16.mxu0 %v476
        %776 = vmatmul.mubr.bf16.gmra.mxu0 %v475
        %v777 = vpop.f32.mrf.mxu0
        %v778 = vadd.f32 0.0, %v777
        %v779 = vpop.f32.mrf.mxu0
        %v780 = vpop.f32.mrf.mxu0
        %v781 = vadd.f32 0.0, %v780
        %v782 = vpop.f32.mrf.mxu0
        %783 = vmatprep.mubr.bf16.mxu0 %v480
        %784 = vmatmul.mubr.bf16.gmra.mxu0 %v479
        %v785 = vpop.f32.mrf.mxu0
        %v786 = vadd.f32 0.0, %v785
        %v787 = vpop.f32.mrf.mxu0
        %v788 = vpop.f32.mrf.mxu0
        %v789 = vadd.f32 0.0, %v788
        %v790 = vpop.f32.mrf.mxu0
        %791 = vmatprep.mubr.bf16.mxu0 %v484
        %792 = vmatmul.mubr.bf16.gmra.mxu0 %v483
        %v793 = vpop.f32.mrf.mxu0
        %v794 = vadd.f32 0.0, %v793
        %v795 = vpop.f32.mrf.mxu0
        %v796 = vpop.f32.mrf.mxu0
        %v797 = vadd.f32 0.0, %v796
        %v798 = vpop.f32.mrf.mxu0
        %799 = vmatprep.mubr.bf16.mxu0 %v488
        %800 = vmatmul.mubr.bf16.gmra.mxu0 %v487
        %v801 = vpop.f32.mrf.mxu0
        %v802 = vadd.f32 0.0, %v801
        %v803 = vpop.f32.mrf.mxu0
        %v804 = vpop.f32.mrf.mxu0
        %v805 = vadd.f32 0.0, %v804
        %v806 = vpop.f32.mrf.mxu0
        %807 = vmatprep.mubr.bf16.mxu0 %v492
        %808 = vmatmul.mubr.bf16.gmra.mxu0 %v491
        %v809 = vpop.f32.mrf.mxu0
        %v810 = vadd.f32 0.0, %v809
        %v811 = vpop.f32.mrf.mxu0
        %v812 = vpop.f32.mrf.mxu0
        %v813 = vadd.f32 0.0, %v812
        %v814 = vpop.f32.mrf.mxu0
        %815 = vdwg.mxu0
        %816 = vmatprep.subr.bf16.mxu0 0
        %817 = vmatpush1.bf16.msra.mxu0 %v678
        %818 = vmatprep.subr.bf16.mxu0 0
        %819 = vmatpush1.bf16.msra.mxu0 %v677
        %820 = vmatprep.subr.bf16.mxu0 0
        %821 = vmatpush1.bf16.msra.mxu0 %v676
        %822 = vmatprep.subr.bf16.mxu0 0
        %823 = vmatpush1.bf16.msra.mxu0 %v675
        %824 = vmatprep.subr.bf16.mxu0 0
        %825 = vmatpush1.bf16.msra.mxu0 %v674
        %826 = vmatprep.subr.bf16.mxu0 0
        %827 = vmatpush1.bf16.msra.mxu0 %v673
        %828 = vmatprep.subr.bf16.mxu0 0
        %829 = vmatpush1.bf16.msra.mxu0 %v672
        %830 = vmatprep.subr.bf16.mxu0 0
        %831 = vmatpush1.bf16.msra.mxu0 %v671
        %832 = vmatprep.subr.bf16.mxu0 0
        %833 = vmatpush2.bf16.msra.mxu0 %v686
        %834 = vmatprep.subr.bf16.mxu0 0
        %835 = vmatpush2.bf16.msra.mxu0 %v685
        %836 = vmatprep.subr.bf16.mxu0 0
        %837 = vmatpush2.bf16.msra.mxu0 %v684
        %838 = vmatprep.subr.bf16.mxu0 0
        %839 = vmatpush2.bf16.msra.mxu0 %v683
        %840 = vmatprep.subr.bf16.mxu0 0
        %841 = vmatpush2.bf16.msra.mxu0 %v682
        %842 = vmatprep.subr.bf16.mxu0 0
        %843 = vmatpush2.bf16.msra.mxu0 %v681
        %844 = vmatprep.subr.bf16.mxu0 0
        %845 = vmatpush2.bf16.msra.mxu0 %v680
        %846 = vmatprep.subr.bf16.mxu0 0
        %847 = vmatpush2.bf16.msra.mxu0 %v679
        %848 = vmatprep.mubr.bf16.mxu0 %v466
        %849 = vmatmul.mubr.bf16.gmra.mxu0 %v465
        %v850 = vpop.f32.mrf.mxu0
        %v851 = vadd.f32 %v754, %v850
        %v852 = vpop.f32.mrf.mxu0
        %v853 = vpop.f32.mrf.mxu0
        %v854 = vadd.f32 %v757, %v853
        %v855 = vpop.f32.mrf.mxu0
        %856 = vmatprep.mubr.bf16.mxu0 %v470
        %857 = vmatmul.mubr.bf16.gmra.mxu0 %v469
        %v858 = vpop.f32.mrf.mxu0
        %v859 = vadd.f32 %v762, %v858
        %v860 = vpop.f32.mrf.mxu0
        %v861 = vpop.f32.mrf.mxu0
        %v862 = vadd.f32 %v765, %v861
        %v863 = vpop.f32.mrf.mxu0
        %864 = vmatprep.mubr.bf16.mxu0 %v474
        %865 = vmatmul.mubr.bf16.gmra.mxu0 %v473
        %v866 = vpop.f32.mrf.mxu0
        %v867 = vadd.f32 %v770, %v866
        %v868 = vpop.f32.mrf.mxu0
        %v869 = vpop.f32.mrf.mxu0
        %v870 = vadd.f32 %v773, %v869
        %v871 = vpop.f32.mrf.mxu0
        %872 = vmatprep.mubr.bf16.mxu0 %v478
        %873 = vmatmul.mubr.bf16.gmra.mxu0 %v477
        %v874 = vpop.f32.mrf.mxu0
        %v875 = vadd.f32 %v778, %v874
        %v876 = vpop.f32.mrf.mxu0
        %v877 = vpop.f32.mrf.mxu0
        %v878 = vadd.f32 %v781, %v877
        %v879 = vpop.f32.mrf.mxu0
        %880 = vmatprep.mubr.bf16.mxu0 %v482
        %881 = vmatmul.mubr.bf16.gmra.mxu0 %v481
        %v882 = vpop.f32.mrf.mxu0
        %v883 = vadd.f32 %v786, %v882
        %v884 = vpop.f32.mrf.mxu0
        %v885 = vpop.f32.mrf.mxu0
        %v886 = vadd.f32 %v789, %v885
        %v887 = vpop.f32.mrf.mxu0
        %888 = vmatprep.mubr.bf16.mxu0 %v486
        %889 = vmatmul.mubr.bf16.gmra.mxu0 %v485
        %v890 = vpop.f32.mrf.mxu0
        %v891 = vadd.f32 %v794, %v890
        %v892 = vpop.f32.mrf.mxu0
        %v893 = vpop.f32.mrf.mxu0
        %v894 = vadd.f32 %v797, %v893
        %v895 = vpop.f32.mrf.mxu0
        %896 = vmatprep.mubr.bf16.mxu0 %v490
        %897 = vmatmul.mubr.bf16.gmra.mxu0 %v489
        %v898 = vpop.f32.mrf.mxu0
        %v899 = vadd.f32 %v802, %v898
        %v900 = vpop.f32.mrf.mxu0
        %v901 = vpop.f32.mrf.mxu0
        %v902 = vadd.f32 %v805, %v901
        %v903 = vpop.f32.mrf.mxu0
        %904 = vmatprep.mubr.bf16.mxu0 %v494
        %905 = vmatmul.mubr.bf16.gmra.mxu0 %v493
        %v906 = vpop.f32.mrf.mxu0
        %v907 = vadd.f32 %v810, %v906
        %v908 = vpop.f32.mrf.mxu0
        %v909 = vpop.f32.mrf.mxu0
        %v910 = vadd.f32 %v813, %v909
        %v911 = vpop.f32.mrf.mxu0
        %912 = vdwg.mxu0
        %v913 = vadd.f32 %v255, %v851
        %v914 = vadd.f32 %v256, %v854
        %v915 = vadd.f32 %v257, %v859
        %v916 = vadd.f32 %v258, %v862
        %v917 = vadd.f32 %v259, %v867
        %v918 = vadd.f32 %v260, %v870
        %v919 = vadd.f32 %v261, %v875
        %v920 = vadd.f32 %v262, %v878
        %v921 = vadd.f32 %v263, %v883
        %v922 = vadd.f32 %v264, %v886
        %v923 = vadd.f32 %v265, %v891
        %v924 = vadd.f32 %v266, %v894
        %v925 = vadd.f32 %v267, %v899
        %v926 = vadd.f32 %v268, %v902
        %v927 = vadd.f32 %v269, %v907
        %v928 = vadd.f32 %v270, %v910
        %vm929 = vcmask 523264
        %930 = vst.msk [vmem:[#allocation2] sm:$0xff] %vm929, %v913
        %931 = vst.msk [vmem:[#allocation2 + $0x8] sm:$0xff] %vm929, %v914
        %932 = vst.msk [vmem:[#allocation2 + $0x10] sm:$0xff] %vm929, %v915
        %933 = vst.msk [vmem:[#allocation2 + $0x18] sm:$0xff] %vm929, %v916
        %934 = vst.msk [vmem:[#allocation2 + $0x20] sm:$0xff] %vm929, %v917
        %935 = vst.msk [vmem:[#allocation2 + $0x28] sm:$0xff] %vm929, %v918
        %936 = vst.msk [vmem:[#allocation2 + $0x30] sm:$0xff] %vm929, %v919
        %937 = vst.msk [vmem:[#allocation2 + $0x38] sm:$0xff] %vm929, %v920
        %938 = vst.msk [vmem:[#allocation2 + $0x40] sm:$0xff] %vm929, %v921
        %939 = vst.msk [vmem:[#allocation2 + $0x48] sm:$0xff] %vm929, %v922
        %940 = vst.msk [vmem:[#allocation2 + $0x50] sm:$0xff] %vm929, %v923
        %941 = vst.msk [vmem:[#allocation2 + $0x58] sm:$0xff] %vm929, %v924
        %942 = vst.msk [vmem:[#allocation2 + $0x60] sm:$0xff] %vm929, %v925
        %943 = vst.msk [vmem:[#allocation2 + $0x68] sm:$0xff] %vm929, %v926
        %944 = vst.msk [vmem:[#allocation2 + $0x70] sm:$0xff] %vm929, %v927
        %945 = vst.msk [vmem:[#allocation2 + $0x78] sm:$0xff] %vm929, %v928
        %p946 = scmp.eq.s32.totalorder %s22, 3
        // Predicated region
        $region41: #{tpu_custom_call.1} parent=31 // pred_check
          %p947 = pneg %p946
        $region42: #{tpu_custom_call.1} parent=31 // pred_check_branch
          %949 = sbr.rel (%p947) target = $region44
        $region43: #{tpu_custom_call.1} parent=31 // pred_region
          %v950 = vld [vmem:[#allocation2] sm:$0xff]
          %v951 = vld [vmem:[#allocation2 + $0x8] sm:$0xff]
          %v952 = vld [vmem:[#allocation2 + $0x10] sm:$0xff]
          %v953 = vld [vmem:[#allocation2 + $0x18] sm:$0xff]
          %v954 = vld [vmem:[#allocation2 + $0x20] sm:$0xff]
          %v955 = vld [vmem:[#allocation2 + $0x28] sm:$0xff]
          %v956 = vld [vmem:[#allocation2 + $0x30] sm:$0xff]
          %v957 = vld [vmem:[#allocation2 + $0x38] sm:$0xff]
          %v958 = vld [vmem:[#allocation2 + $0x40] sm:$0xff]
          %v959 = vld [vmem:[#allocation2 + $0x48] sm:$0xff]
          %v960 = vld [vmem:[#allocation2 + $0x50] sm:$0xff]
          %v961 = vld [vmem:[#allocation2 + $0x58] sm:$0xff]
          %v962 = vld [vmem:[#allocation2 + $0x60] sm:$0xff]
          %v963 = vld [vmem:[#allocation2 + $0x68] sm:$0xff]
          %v964 = vld [vmem:[#allocation2 + $0x70] sm:$0xff]
          %v965 = vld [vmem:[#allocation2 + $0x78] sm:$0xff]
          %v966 = vld [vmem:[%s2] sm:$0x1]
          %v968 = vlaneseq
          %v969 = vshrl.u32 %v968, 7
          %v970 = vsub.s32 0, %v969
          %v971 = vrot.slane %v966, %v970
          %v973 = vadd.f32 %v950, %v971
          %v974 = vadd.f32 %v951, %v971
          %v975 = vadd.f32 %v952, %v971
          %v976 = vadd.f32 %v953, %v971
          %v977 = vadd.f32 %v954, %v971
          %v978 = vadd.f32 %v955, %v971
          %v979 = vadd.f32 %v956, %v971
          %v980 = vadd.f32 %v957, %v971
          %v981 = vadd.f32 %v958, %v971
          %v982 = vadd.f32 %v959, %v971
          %v983 = vadd.f32 %v960, %v971
          %v984 = vadd.f32 %v961, %v971
          %v985 = vadd.f32 %v962, %v971
          %v986 = vadd.f32 %v963, %v971
          %v987 = vadd.f32 %v964, %v971
          %v988 = vadd.f32 %v965, %v971
          %v989 = vpack.c.bf16 %v974, %v973
          %v990 = vpack.c.bf16 %v976, %v975
          %v991 = vpack.c.bf16 %v978, %v977
          %v992 = vpack.c.bf16 %v980, %v979
          %v993 = vpack.c.bf16 %v982, %v981
          %v994 = vpack.c.bf16 %v984, %v983
          %v995 = vpack.c.bf16 %v986, %v985
          %v996 = vpack.c.bf16 %v988, %v987
          %v1005 = vunpack.c.l.b16 %v989
          %v1006 = vunpack.c.h.b16 %v989
          %v1007 = vunpack.c.l.b16 %v990
          %v1008 = vunpack.c.h.b16 %v990
          %v1009 = vunpack.c.l.b16 %v991
          %v1010 = vunpack.c.h.b16 %v991
          %v1011 = vunpack.c.l.b16 %v992
          %v1012 = vunpack.c.h.b16 %v992
          %v1013 = vunpack.c.l.b16 %v993
          %v1014 = vunpack.c.h.b16 %v993
          %v1015 = vunpack.c.l.b16 %v994
          %v1016 = vunpack.c.h.b16 %v994
          %v1017 = vunpack.c.l.b16 %v995
          %v1018 = vunpack.c.h.b16 %v995
          %v1019 = vunpack.c.l.b16 %v996
          %v1020 = vunpack.c.h.b16 %v996
          %v1021 = vpack.c.b16 %v1005, %v1005
          %v1022 = vpack.c.b16 %v1006, %v1006
          %v1023 = vpack.c.b16 %v1007, %v1007
          %v1024 = vpack.c.b16 %v1008, %v1008
          %v1025 = vpack.c.b16 %v1009, %v1009
          %v1026 = vpack.c.b16 %v1010, %v1010
          %v1027 = vpack.c.b16 %v1011, %v1011
          %v1028 = vpack.c.b16 %v1012, %v1012
          %v1029 = vpack.c.b16 %v1013, %v1013
          %v1030 = vpack.c.b16 %v1014, %v1014
          %v1031 = vpack.c.b16 %v1015, %v1015
          %v1032 = vpack.c.b16 %v1016, %v1016
          %v1033 = vpack.c.b16 %v1017, %v1017
          %v1034 = vpack.c.b16 %v1018, %v1018
          %v1035 = vpack.c.b16 %v1019, %v1019
          %v1036 = vpack.c.b16 %v1020, %v1020
          %vm1053 = vcmask 519168
          %1054 = vst.msk [vmem:[%s231] sm:$0xf] %vm1053, %v1021
          %1055 = vst.msk [vmem:[%s231 + $0x4] sm:$0xf] %vm1053, %v1022
          %1056 = vst.msk [vmem:[%s231 + $0x8] sm:$0xf] %vm1053, %v1023
          %1057 = vst.msk [vmem:[%s231 + $0xc] sm:$0xf] %vm1053, %v1024
          %1058 = vst.msk [vmem:[%s231 + $0x10] sm:$0xf] %vm1053, %v1025
          %1059 = vst.msk [vmem:[%s231 + $0x14] sm:$0xf] %vm1053, %v1026
          %1060 = vst.msk [vmem:[%s231 + $0x18] sm:$0xf] %vm1053, %v1027
          %1061 = vst.msk [vmem:[%s231 + $0x1c] sm:$0xf] %vm1053, %v1028
          %1062 = vst.msk [vmem:[%s231 + $0x20] sm:$0xf] %vm1053, %v1029
          %1063 = vst.msk [vmem:[%s231 + $0x24] sm:$0xf] %vm1053, %v1030
          %1064 = vst.msk [vmem:[%s231 + $0x28] sm:$0xf] %vm1053, %v1031
          %1065 = vst.msk [vmem:[%s231 + $0x2c] sm:$0xf] %vm1053, %v1032
          %1066 = vst.msk [vmem:[%s231 + $0x30] sm:$0xf] %vm1053, %v1033
          %1067 = vst.msk [vmem:[%s231 + $0x34] sm:$0xf] %vm1053, %v1034
          %1068 = vst.msk [vmem:[%s231 + $0x38] sm:$0xf] %vm1053, %v1035
          %1069 = vst.msk [vmem:[%s231 + $0x3c] sm:$0xf] %vm1053, %v1036
        $region44: #{tpu_custom_call.1} parent=31 // pred_fallthru
          _
        %s1070 = smul.u32 16, %s21
        %p1071 = scmp.lt.s32.totalorder %s1070, 31
        %s1072 = scalar_select %p1071, %s1070, 31
        %s1073 = smul.addr %s1072, 4
        %s1074 = scalar_lea.vmem %s3, %s1073
        // Predicated region
        $region45: #{tpu_custom_call.1} parent=31 // pred_check
          %p1075 = pneg %p122
        $region46: #{tpu_custom_call.1} parent=31 // pred_check_branch
          %1077 = sbr.rel (%p1075) target = $region48
        $region47: #{tpu_custom_call.1} parent=31 // pred_region
          %s1078 = smul.u32 16, %s21
        $region48: #{tpu_custom_call.1} parent=31 // pred_fallthru
          _
      $region32: #{tpu_custom_call.1} parent=5 // pred_fallthru
        _
      %p1079 = scmp.le.s32.totalorder 2, %s12
      // Predicated region
      $region49: #{tpu_custom_call.1} parent=5 // pred_check
        %p1080 = pneg %p1079
      $region50: #{tpu_custom_call.1} parent=5 // pred_check_branch
        %1082 = sbr.rel (%p1080) target = $region52
      $region51: #{tpu_custom_call.1} parent=5 // pred_region
        %s1083 = ssub.s32 %s12, 2
        // Predicated region
        $region53: #{tpu_custom_call.1} parent=51 // pred_check
          %p1084 = pneg %p128
        $region54: #{tpu_custom_call.1} parent=51 // pred_check_branch
          %1086 = sbr.rel (%p1084) target = $region56
        $region55: #{tpu_custom_call.1} parent=51 // pred_region
          %s1087 = smul.u32 16, %s23
          %p1088 = scmp.lt.s32.totalorder %s1087, 31
          %s1089 = scalar_select %p1088, %s1087, 31
          %s1090 = smul.addr %s1089, 4
          %s1091 = scalar_lea.vmem %s3, %s1090
        $region56: #{tpu_custom_call.1} parent=51 // pred_fallthru
          _
      $region52: #{tpu_custom_call.1} parent=5 // pred_fallthru
        _
    $region6: #{tpu_custom_call.1} parent=1 // loop_footer
      %s16 = sadd.s32 1, %s12
    $region7: #{tpu_custom_call.1} parent=1 // loop_footer_branch
      %11 = sbr.rel target = $region3
    $region8: #{tpu_custom_call.1} parent=1 // loop_exit
      _
    %1092 = vsyncpa [#allocation4], 1
    %s1093 = scalar_lea.sflag [#allocation4], 1
    %1094 = vsyncpa %s1093, 1

</llo_original>
